<compile_context>
chip_gen: v7x
topology: tpu7x:2x2x1
jax: 0.10.0
libtpu: 0.0.40
codegen_flags: <defaults>
</compile_context>

<pallas_src>
import math

import jax
import jax.numpy as jnp
from jax.experimental import pallas as pl
from jax.experimental.pallas import tpu as pltpu


def _batchout_kernel(coef_ref, x_ref, o_ref):
    """out = x + coef * (x[0] - x); blended in f32, cast back on store."""
    coef = coef_ref[0]                       # (1,) f32 scalar held in SMEM
    x = x_ref[...].astype(jnp.float32)       # (B, tr, lane) or (B, tf)
    x0 = x[0:1]                              # batch element 0's tile (broadcasts)
    o_ref[...] = (x + coef * (x0 - x)).astype(o_ref.dtype)


def _fused_lerp(x, coef):
    """Plain-XLA fallback for tiny / degenerate shapes."""
    xf = x.astype(jnp.float32)
    return (xf + jnp.float32(coef) * (xf[0:1] - xf)).astype(x.dtype)


def _sublane_multiple(dtype):
    # Native second-minor packing: 8 rows (f32), 16 (bf16/f16), 32 (int8/fp8).
    return max(8, 32 // jnp.dtype(dtype).itemsize)


def _pick_lane_dim(f):
    """Largest lane-dense divisor of f (f is a multiple of 128 on this path)."""
    for lane in (1024, 512, 256, 128):
        if f % lane == 0:
            return lane
    return 128


def _default_tile_bytes():
    """Chip-aware block-size target (per-generation tuning from the review)."""
    try:
        kind = jax.devices()[0].device_kind.lower()
    except Exception:
        kind = ""
    if "v5" in kind:
        return 2 << 20   # v5e: 16 MiB scoped-VMEM default -> 4 blocks stay <= ~9 MiB
    if "v7" in kind or "7x" in kind:
        return 4 << 20   # v7x: ~2.3x v6e HBM; bigger blocks amortize per-step cost
    return 2 << 20       # v6e and everything else


def batchout_inference(x, n, *, target_tile_bytes=None, min_pallas_bytes=1 << 20):
    """Pallas equivalent of Batchout_Inference(n).forward(x); x is NCHW."""
    coef = 1.0 - float(n)                        # self.n in the PyTorch module
    orig_shape = x.shape
    B = orig_shape[0]
    F = math.prod(orig_shape[1:]) if len(orig_shape) > 1 else 1
    itemsize = jnp.dtype(x.dtype).itemsize
    total_bytes = B * F * itemsize

    # Small-tensor bailout: the grid collapses to ~1 step and the fixed
    # pallas_call + per-step overhead exceeds the streaming time.
    if B < 1 or F < 128 or total_bytes < min_pallas_bytes:
        return _fused_lerp(x, coef)

    if target_tile_bytes is None:
        target_tile_bytes = _default_tile_bytes()

    sub = _sublane_multiple(x.dtype)
    coef_arr = jnp.asarray([coef], dtype=jnp.float32)

    if F % 128 == 0:
        # Main path: (B, R, lane) view -> lane-dense, unmasked stores.
        lane = _pick_lane_dim(F)
        R = F // lane
        x_view = x.reshape(B, R, lane)
        row_bytes = B * lane * itemsize              # bytes per tr=1 slice
        tr = max(1, target_tile_bytes // row_bytes)
        if tr >= R:
            tr = R                                   # full extent (always legal)
        else:
            # Dtype-native sublane rounding keeps packed dtypes fully packed.
            tr = min(R, max(sub, (tr // sub) * sub))
        grid = (pl.cdiv(R, tr),)
        block_shape = (B, tr, lane)
        block_bytes = B * tr * lane * itemsize
        index_map = lambda t: (0, t, 0)
    else:
        # Ragged feature count: 2-D view, lane axis tiled in multiples of 128;
        # Pallas masks the partial last block in-kernel (no jnp.pad HBM copy).
        x_view = x.reshape(B, F)
        padded_B = -(-B // sub) * sub                # VMEM sublane padding of leading dim
        tf = max(128, (target_tile_bytes // (padded_B * itemsize)) // 128 * 128)
        if tf >= F:
            tf = F                                   # single full-extent block
        grid = (pl.cdiv(F, tf),)
        block_shape = (B, tf)
        block_bytes = padded_B * tf * itemsize
        index_map = lambda t: (0, t)

    # VMEM budget: in + out, double-buffered => 4 blocks (+ slack).
    needed_vmem = 4 * block_bytes + (1 << 20)
    if needed_vmem > (48 << 20):
        # Degenerate shape (huge batch * tiny features): let XLA fuse it.
        return _fused_lerp(x, coef)
    vmem_limit = None
    if needed_vmem > (12 << 20):
        # e.g. 4 MiB blocks on v7x -> 24 MiB scoped limit; well under physical
        # VMEM on every generation (v7x: 64 MiB, v5e/v6e: 128 MiB).
        vmem_limit = min(max(needed_vmem + (4 << 20), 24 << 20), 48 << 20)

    out = pl.pallas_call(
        _batchout_kernel,
        out_shape=jax.ShapeDtypeStruct(x_view.shape, x.dtype),
        grid=grid,
        in_specs=[
            # coef scalar lives in SMEM -> no recompile per dropout rate.
            pl.BlockSpec(memory_space=pltpu.MemorySpace.SMEM),
            # One block per feature tile carrying ALL batch rows (x[0] included),
            # so there is no separate x[0] operand to (re-)fetch.
            pl.BlockSpec(block_shape, index_map),
        ],
        out_specs=pl.BlockSpec(block_shape, index_map),
        compiler_params=pltpu.CompilerParams(
            # Single independent axis; "parallel" lets v7x shard the feature
            # tiles across its 2 TensorCores (this is pure HBM-bandwidth work).
            dimension_semantics=("parallel",),
            vmem_limit_bytes=vmem_limit,
        ),
    )(coef_arr, x_view)

    return out.reshape(orig_shape)


def _reference(x, n):
    coef = 1.0 - float(n)
    sample = jnp.broadcast_to(x[0:1], x.shape)    # x[r] with r = zeros(batch)
    d = sample - x
    return (x.astype(jnp.float32) + jnp.float32(coef) * d.astype(jnp.float32)).astype(x.dtype)


if __name__ == "__main__":
    root = jax.random.PRNGKey(0)
    k1, k2, k3, k4 = jax.random.split(root, 4)
    n = 0.7   # module hyperparameter (self.n = 1 - n = 0.3)

    # 1) Required small shape; force the Pallas path (bypass small-size bailout).
    x1 = jax.random.normal(k1, (2, 4, 16, 16), dtype=jnp.float32)
    o1 = jax.block_until_ready(batchout_inference(x1, n, min_pallas_bytes=0))
    assert o1.shape == x1.shape and o1.dtype == x1.dtype
    assert jnp.allclose(o1, _reference(x1, n), atol=1e-6, rtol=1e-6)

    # 2) Multi-tile f32 path (small tile target so the feature-tile grid has >1 step).
    x2 = jax.random.normal(k2, (2, 16, 32, 32), dtype=jnp.float32)
    o2 = jax.block_until_ready(
        batchout_inference(x2, n, target_tile_bytes=64 * 1024, min_pallas_bytes=0))
    assert jnp.allclose(o2, _reference(x2, n), atol=1e-6, rtol=1e-6)

    # 3) bf16 path (exercises dtype-aware sublane rounding).
    x3 = jax.random.normal(k3, (2, 3, 16, 16), dtype=jnp.bfloat16)
    o3 = jax.block_until_ready(batchout_inference(x3, n, min_pallas_bytes=0))
    assert o3.dtype == jnp.bfloat16
    assert jnp.allclose(o3.astype(jnp.float32), _reference(x3, n).astype(jnp.float32),
                        atol=2e-2, rtol=2e-2)

    # 4) Ragged feature count (F % 128 != 0) with a masked partial lane tile.
    x4 = jax.random.normal(k4, (2, 3, 7, 7), dtype=jnp.float32)
    o4 = jax.block_until_ready(
        batchout_inference(x4, n, target_tile_bytes=4096, min_pallas_bytes=0))
    assert jnp.allclose(o4, _reference(x4, n), atol=1e-6, rtol=1e-6)

    # 5) Default small-tensor bailout (pure-XLA fused path) stays correct.
    o5 = jax.block_until_ready(batchout_inference(x1, n))
    assert jnp.allclose(o5, _reference(x1, n), atol=1e-6, rtol=1e-6)

    print("KERNEL_OK")
</pallas_src>

<mosaic_0001>
module attributes {stable_mosaic.version = 11 : i64} {
  func.func @_batchout_kernel(%arg0: i32, %arg1: memref<1xf32, #tpu.memory_space<smem>>, %arg2: memref<2x1x1024xf32, #tpu.memory_space<vmem>>, %arg3: memref<2x1x1024xf32, #tpu.memory_space<vmem>>) attributes {dimension_semantics = [#tpu.dimension_semantics<parallel>], iteration_bounds = array<i64: 1>, scalar_prefetch = 0 : i64, scratch_operands = 0 : i64, tpu.core_type = #tpu.core_type<tc>, window_params = [{transform_indices = @transform_0, window_bounds = array<i64: 1>}, {transform_indices = @transform_1, window_bounds = array<i64: 2, 1, 1024>}, {transform_indices = @transform_2, window_bounds = array<i64: 2, 1, 1024>}]} {
    %c0 = arith.constant 0 : index
    %0 = memref.load %arg1[%c0] : memref<1xf32, #tpu.memory_space<smem>>
    %c0_0 = arith.constant 0 : index
    %c0_1 = arith.constant 0 : index
    %c0_2 = arith.constant 0 : index
    %1 = vector.load %arg2[%c0_0, %c0_1, %c0_2] : memref<2x1x1024xf32, #tpu.memory_space<vmem>>, vector<2x1x1024xf32>
    %2 = vector.extract_strided_slice %1 {offsets = [0, 0, 0], sizes = [1, 1, 1024], strides = [1, 1, 1]} : vector<2x1x1024xf32> to vector<1x1x1024xf32>
    %3 = vector.broadcast %2 : vector<1x1x1024xf32> to vector<2x1x1024xf32>
    %4 = arith.subf %3, %1 : vector<2x1x1024xf32>
    %5 = vector.broadcast %0 : f32 to vector<2x1x1024xf32>
    %6 = arith.mulf %5, %4 : vector<2x1x1024xf32>
    %7 = arith.addf %1, %6 : vector<2x1x1024xf32>
    %c0_3 = arith.constant 0 : index
    %c0_4 = arith.constant 0 : index
    %c0_5 = arith.constant 0 : index
    %8 = vector.load %arg3[%c0_3, %c0_4, %c0_5] : memref<2x1x1024xf32, #tpu.memory_space<vmem>>, vector<2x1x1024xf32>
    tpu.vector_store %arg3[%c0_3, %c0_4, %c0_5], %7 {strides = array<i32>} : memref<2x1x1024xf32, #tpu.memory_space<vmem>>, vector<2x1x1024xf32>,
    return
  }
  func.func @transform_0(%arg0: i32) -> i32 {
    %c0_i32 = arith.constant 0 : i32
    %c0_i32_0 = arith.constant 0 : i32
    return %c0_i32 : i32
  }
  func.func @transform_1(%arg0: i32) -> (i32, i32, i32) {
    %c0_i32 = arith.constant 0 : i32
    %c0_i32_0 = arith.constant 0 : i32
    %c0_i32_1 = arith.constant 0 : i32
    return %c0_i32, %arg0, %c0_i32_0 : i32, i32, i32
  }
  func.func @transform_2(%arg0: i32) -> (i32, i32, i32) {
    %c0_i32 = arith.constant 0 : i32
    %c0_i32_0 = arith.constant 0 : i32
    %c0_i32_1 = arith.constant 0 : i32
    return %c0_i32, %arg0, %c0_i32_0 : i32, i32, i32
  }
}

</mosaic_0001>

<llo_original>
// kernel: tpu_custom_call.1
$region0: #{tpu_custom_call.1}
  #allocation0 [shape = 'u32[]', space=smem, size = 0x4, offset = 0x4, fixed_abs, tag = 'smem constant byte address 0x4 - core index']
  #allocation1 [shape = 'u32[144,128]{1,0:T(1,128)}', space=vmem, size = 0x12000, scoped, tag = 'internal scratch']
  #allocation2 [shape = 'f32[1]{0:T(128)S(6)}', space=smem, size = 0x200, scoped, tag = 'scoped memory for tpu_custom_call.1']
  %s0 = inlined_call_operand.<no memory space> [shape: f32[1], index: 0, kind: input, shape index: {}]
  %s1 = inlined_call_operand.hbm [shape: f32[2,1,1024], index: 1, kind: input, shape index: {}]
  %s2 = inlined_call_operand.hbm [shape: f32[2,1,1024], index: 2, kind: output, shape index: {}]
  %s3 = sld [smem:[#allocation0]]
  $region22: #{tpu_custom_call.1} parent=0
    _
  %s5 = ssub.s32 1, %s3
  %s6 = scalar_select 0, %s5, %s3
  %7 = sst [smem:[#allocation2]] %s0
  $region1: #{tpu_custom_call.1} parent=0
    #allocation3 [shape = 'u8[8192]{0}', space=vmem, size = 0x2000, scoped, tag = 'input window, operand 1, single buffered']
    #allocation4 [shape = 's32[1]{0}', space=sflag, size = 0x4, scoped, tag = 'scoped memory for tpu_custom_call.1']
    #allocation5 [shape = 's32[1]{0}', space=sflag, size = 0x4, scoped, tag = 'scoped memory for tpu_custom_call.1']
    #allocation6 [shape = 'u8[8192]{0}', space=vmem, size = 0x2000, scoped, tag = 'output window, operand 0, single buffered']
    %8 = vsyncpa [#allocation4], 0
    %9 = vsyncpa [#allocation5], 0
    // Predicated region
    $region2: #{tpu_custom_call.1} parent=1 // pred_check
      _
    $region3: #{tpu_custom_call.1} parent=1 // pred_check_branch
      %11 = sbr.rel (0) target = $region5
    $region4: #{tpu_custom_call.1} parent=1 // pred_region
      _
    $region5: #{tpu_custom_call.1} parent=1 // pred_fallthru
      _
    // Predicated region
    $region6: #{tpu_custom_call.1} parent=1 // pred_check
      _
    $region7: #{tpu_custom_call.1} parent=1 // pred_check_branch
      %13 = sbr.rel (0) target = $region9
    $region8: #{tpu_custom_call.1} parent=1 // pred_region
      %s15 = ssub.s32 256, 256
      %16 = vsyncadd [#allocation4], %s15
      %s17 = sshll.u32 [#allocation3], 4
      %s18 = int_to_ptr.vmem [resolvable:$true] %s17
      %23 = dma.hbm_to_vmem [thread:$0]  %s1, 256, %s18, [#allocation4], 128, 128, 8
    $region9: #{tpu_custom_call.1} parent=1 // pred_fallthru
      _
    // Predicated region
    $region10: #{tpu_custom_call.1} parent=1 // pred_check
      _
    $region11: #{tpu_custom_call.1} parent=1 // pred_check_branch
      %25 = sbr.rel (0) target = $region13
    $region12: #{tpu_custom_call.1} parent=1 // pred_region
      %26 = dma.done [#allocation4], 256
    $region13: #{tpu_custom_call.1} parent=1 // pred_fallthru
      _
    %s27 = sld [smem:[#allocation2]]
    %v28 = vld [vmem:[#allocation3] sm:$0xff]
    %v29 = vld [vmem:[#allocation3 + $0x8] sm:$0xff]
    %v30 = vsub.f32 %v28, %v28
    %v31 = vsub.f32 %v28, %v29
    %v32 = vstv %s27
    %v33 = vmul.f32 %v32, %v30
    %v34 = vmul.f32 %v32, %v31
    %v35 = vadd.f32 %v28, %v33
    %v36 = vadd.f32 %v29, %v34
    %37 = vst [vmem:[#allocation6] sm:$0xff] %v35
    %38 = vst [vmem:[#allocation6 + $0x8] sm:$0xff] %v36
    // Predicated region
    $region14: #{tpu_custom_call.1} parent=1 // pred_check
      _
    $region15: #{tpu_custom_call.1} parent=1 // pred_check_branch
      %40 = sbr.rel (0) target = $region17
    $region16: #{tpu_custom_call.1} parent=1 // pred_region
      %s42 = ssub.s32 256, 256
      %43 = vsyncadd [#allocation5], %s42
      %s44 = sshll.u32 [#allocation6], 4
      %s45 = int_to_ptr.vmem [resolvable:$true] %s44
      %50 = dma.vmem_to_hbm [thread:$0]  %s45, 256, %s2, [#allocation5], 128, 128, 8
    $region17: #{tpu_custom_call.1} parent=1 // pred_fallthru
      _
    // Predicated region
    $region18: #{tpu_custom_call.1} parent=1 // pred_check
      _
    $region19: #{tpu_custom_call.1} parent=1 // pred_check_branch
      %52 = sbr.rel (0) target = $region21
    $region20: #{tpu_custom_call.1} parent=1 // pred_region
      %53 = dma.done [#allocation5], 256
    $region21: #{tpu_custom_call.1} parent=1 // pred_fallthru
      _
    %54 = vsyncpa [#allocation4], 1
    %55 = vsyncpa [#allocation5], 1

</llo_original>
